<compile_context>
chip_gen: v7x
topology: tpu7x:2x2x1
jax: 0.10.0
libtpu: 0.0.40
codegen_flags: <defaults>
</compile_context>

<pallas_src>
import jax
import jax.numpy as jnp
from jax.experimental import pallas as pl
from jax.experimental.pallas import tpu as pltpu


def _round_up(x, m):
    return ((x + m - 1) // m) * m


def _proto_mlp_kernel(ids_ref, table_ref, w1_ref, b1_ref, w2_ref, b2_ref,
                      out_ref, cls_ref):
    """Fused prototype MLP: per-class MLP once + per-tile one-hot gather."""
    # --- Phase 1: class-level MLP, computed once (scratch persists across
    # grid steps; axis is "arbitrary" so step 0 always runs first).
    @pl.when(pl.program_id(0) == 0)
    def _():
        emb = table_ref[...]                                     # [C_pad, F_pad]
        hid = jnp.dot(emb, w1_ref[...],
                      preferred_element_type=jnp.float32)        # [C_pad, H_pad]
        hid = jnp.maximum(hid + b1_ref[...], 0.0)                # bias+ReLU in f32
        out = jnp.dot(hid.astype(w2_ref.dtype), w2_ref[...],
                      preferred_element_type=jnp.float32)        # [C_pad, F_pad]
        cls_ref[...] = out + b2_ref[...]                         # f32 class table

    # --- Phase 2: gather this tile's rows from the class table (MXU one-hot).
    # TODO(synk): PyTorch nn.Embedding raises on out-of-range class_id; the
    # one-hot gather silently yields a zero row instead.
    ids = ids_ref[...]                                           # [TN, 1] int32
    tn = ids.shape[0]
    c_pad = cls_ref.shape[0]
    classes = jax.lax.broadcasted_iota(jnp.int32, (tn, c_pad), 1)
    onehot = (classes == ids).astype(jnp.float32)                # [TN, C_pad]
    out_ref[...] = jnp.dot(onehot, cls_ref[...],
                           preferred_element_type=jnp.float32
                           ).astype(out_ref.dtype)               # [TN, F_pad]


def prepare_params(emb_table, w1, b1, w2, b2, *, param_dtype=jnp.bfloat16):
    """Pad weights once to lane-dense (multiple-of-128) shapes and cast.

    w1 is [feature_dim, hidden] and w2 is [hidden, feature_dim] (pre-transposed
    relative to PyTorch's nn.Linear storage so the kernel does [in]@[in,out]).
    Zero padding is exact: padded rows/cols contribute nothing to the matmuls.
    """
    num_classes, f = emb_table.shape
    h = w1.shape[1]
    c_pad = _round_up(num_classes, 128)
    f_pad = _round_up(f, 128)
    h_pad = _round_up(h, 128)

    table_p = jnp.zeros((c_pad, f_pad), param_dtype)
    table_p = table_p.at[:num_classes, :f].set(emb_table.astype(param_dtype))
    w1_p = jnp.zeros((f_pad, h_pad), param_dtype).at[:f, :h].set(
        w1.astype(param_dtype))
    w2_p = jnp.zeros((h_pad, f_pad), param_dtype).at[:h, :f].set(
        w2.astype(param_dtype))
    b1_p = jnp.zeros((1, h_pad), jnp.float32).at[:, :h].set(
        jnp.reshape(b1, (1, h)).astype(jnp.float32))
    b2_p = jnp.zeros((1, f_pad), jnp.float32).at[:, :f].set(
        jnp.reshape(b2, (1, f)).astype(jnp.float32))
    return dict(table=table_p, w1=w1_p, b1=b1_p, w2=w2_p, b2=b2_p,
                feature_dim=f, hidden_dim=h, num_classes=num_classes)


def trainable_prototypes_forward(class_id, params, *, block_n=256):
    """Forward pass: fused (class MLP + gather) Pallas kernel."""
    class_id = jnp.asarray(class_id, dtype=jnp.int32)
    n = class_id.shape[0]
    table, w1, b1, w2, b2 = (params["table"], params["w1"], params["b1"],
                             params["w2"], params["b2"])
    f = params["feature_dim"]
    c_pad, f_pad = table.shape
    h_pad = w1.shape[1]

    # Batch tiling: sublane-aligned tile; the grid pipelines the per-tile
    # id-load / out-writeback while weights + class table stay VMEM-resident.
    if n <= block_n:
        tn = _round_up(max(n, 1), 8)
    else:
        tn = block_n
    n_pad = _round_up(n, tn)
    ids = jnp.zeros((n_pad, 1), jnp.int32).at[:n, 0].set(class_id)

    # VMEM budget: resident params + class-table scratch + double-buffered
    # per-tile ids/out + headroom.
    psize = jnp.dtype(table.dtype).itemsize
    resident = ((c_pad * f_pad + f_pad * h_pad + h_pad * f_pad) * psize
                + 8 * (h_pad + f_pad) * 4            # biases (sublane-padded)
                + c_pad * f_pad * 4)                 # class-output scratch
    per_tile = 2 * (tn * 128 * 4 + tn * f_pad * 4)   # double-buffered ids / out
    vmem_bytes = int(min(max(2 * resident + per_tile + (4 << 20), 16 << 20),
                         48 << 20))

    out = pl.pallas_call(
        _proto_mlp_kernel,
        out_shape=jax.ShapeDtypeStruct((n_pad, f_pad), jnp.float32),
        grid=(n_pad // tn,),
        in_specs=[
            pl.BlockSpec((tn, 1), lambda i: (i, 0)),          # class ids (tiled)
            pl.BlockSpec((c_pad, f_pad), lambda i: (0, 0)),   # emb table (resident)
            pl.BlockSpec((f_pad, h_pad), lambda i: (0, 0)),   # W1 (resident)
            pl.BlockSpec((1, h_pad), lambda i: (0, 0)),       # b1 (resident)
            pl.BlockSpec((h_pad, f_pad), lambda i: (0, 0)),   # W2 (resident)
            pl.BlockSpec((1, f_pad), lambda i: (0, 0)),       # b2 (resident)
        ],
        out_specs=pl.BlockSpec((tn, f_pad), lambda i: (i, 0)),
        scratch_shapes=[pltpu.VMEM((c_pad, f_pad), jnp.float32)],
        compiler_params=pltpu.CompilerParams(
            # "arbitrary": the class-table scratch is filled on grid step 0 and
            # reused by later steps, so the batch axis must run in order on one
            # core (megacore sharding would leave the other core's scratch
            # uninitialized).  The gather phase is HBM-write bound, so this
            # costs nothing.
            dimension_semantics=("arbitrary",),
            vmem_limit_bytes=vmem_bytes),
    )(ids, table, w1, b1, w2, b2)

    # Strip batch / lane padding.
    return out[:n, :f]


def init_params(key, num_classes, server_hidden_dim, feature_dim):
    """Deterministic init mirroring PyTorch defaults (shapes are what matters)."""
    k_emb, k_w1, k_b1, k_w2, k_b2 = jax.random.split(key, 5)
    # nn.Embedding default: N(0, 1)
    emb_table = jax.random.normal(k_emb, (num_classes, feature_dim), jnp.float32)
    # nn.Linear default: U(-1/sqrt(fan_in), 1/sqrt(fan_in))
    lim1 = 1.0 / jnp.sqrt(feature_dim)
    w1 = jax.random.uniform(k_w1, (feature_dim, server_hidden_dim),
                            jnp.float32, -lim1, lim1)
    b1 = jax.random.uniform(k_b1, (1, server_hidden_dim),
                            jnp.float32, -lim1, lim1)
    lim2 = 1.0 / jnp.sqrt(server_hidden_dim)
    w2 = jax.random.uniform(k_w2, (server_hidden_dim, feature_dim),
                            jnp.float32, -lim2, lim2)
    b2 = jax.random.uniform(k_b2, (1, feature_dim),
                            jnp.float32, -lim2, lim2)
    return emb_table, w1, b1, w2, b2


if __name__ == "__main__":
    num_classes = 10
    feature_dim = 32
    server_hidden_dim = 64

    key = jax.random.PRNGKey(0)
    emb_table, w1, b1, w2, b2 = init_params(
        key, num_classes, server_hidden_dim, feature_dim)

    # --- check 1: small batch, f32 params (single-tile path, tight tolerance).
    cid_small = jax.random.randint(
        jax.random.PRNGKey(1), (8,), 0, num_classes, dtype=jnp.int32)
    params_f32 = prepare_params(emb_table, w1, b1, w2, b2,
                                param_dtype=jnp.float32)
    out_f32 = trainable_prototypes_forward(cid_small, params_f32)
    out_f32 = jax.block_until_ready(out_f32)

    emb_s = jnp.take(emb_table, cid_small, axis=0)
    ref_s = jnp.maximum(emb_s @ w1 + b1, 0.0) @ w2 + b2
    assert out_f32.shape == (8, feature_dim)
    assert jnp.allclose(out_f32, ref_s, atol=5e-3, rtol=5e-3)

    # --- check 2: ragged larger batch, bf16 params (multi-step grid: exercises
    #     the class-table-scratch reuse across steps; relaxed tolerance).
    cid_big = jax.random.randint(
        jax.random.PRNGKey(2), (300,), 0, num_classes, dtype=jnp.int32)
    params_bf16 = prepare_params(emb_table, w1, b1, w2, b2,
                                 param_dtype=jnp.bfloat16)
    out_bf16 = trainable_prototypes_forward(cid_big, params_bf16, block_n=128)
    out_bf16 = jax.block_until_ready(out_bf16)

    emb_b = jnp.take(emb_table, cid_big, axis=0)
    ref_b = jnp.maximum(emb_b @ w1 + b1, 0.0) @ w2 + b2
    assert out_bf16.shape == (300, feature_dim)
    assert jnp.allclose(out_bf16, ref_b, atol=5e-2, rtol=5e-2)

    print("KERNEL_OK")
</pallas_src>

<mosaic_0001>
module attributes {stable_mosaic.version = 11 : i64} {
  func.func @_proto_mlp_kernel(%arg0: i32, %arg1: memref<8x1xi32, #tpu.memory_space<vmem>>, %arg2: memref<128x128xf32, #tpu.memory_space<vmem>>, %arg3: memref<128x128xf32, #tpu.memory_space<vmem>>, %arg4: memref<1x128xf32, #tpu.memory_space<vmem>>, %arg5: memref<128x128xf32, #tpu.memory_space<vmem>>, %arg6: memref<1x128xf32, #tpu.memory_space<vmem>>, %arg7: memref<8x128xf32, #tpu.memory_space<vmem>>, %arg8: memref<128x128xf32, #tpu.memory_space<vmem>>) attributes {dimension_semantics = [#tpu.dimension_semantics<arbitrary>], iteration_bounds = array<i64: 1>, scalar_prefetch = 0 : i64, scratch_operands = 1 : i64, tpu.core_type = #tpu.core_type<tc>, window_params = [{transform_indices = @transform_0, window_bounds = array<i64: 8, 1>}, {pipeline_mode = #tpu.pipeline_mode<synchronous>, transform_indices = @transform_1, window_bounds = array<i64: 128, 128>}, {pipeline_mode = #tpu.pipeline_mode<synchronous>, transform_indices = @transform_2, window_bounds = array<i64: 128, 128>}, {pipeline_mode = #tpu.pipeline_mode<synchronous>, transform_indices = @transform_3, window_bounds = array<i64: 1, 128>}, {pipeline_mode = #tpu.pipeline_mode<synchronous>, transform_indices = @transform_4, window_bounds = array<i64: 128, 128>}, {pipeline_mode = #tpu.pipeline_mode<synchronous>, transform_indices = @transform_5, window_bounds = array<i64: 1, 128>}, {transform_indices = @transform_6, window_bounds = array<i64: 8, 128>}]} {
    %c0_i32 = arith.constant 0 : i32
    %0 = arith.cmpi eq, %arg0, %c0_i32 : i32
    %1 = arith.extui %0 : i1 to i32
    %c0_i32_0 = arith.constant 0 : i32
    %2 = arith.cmpi ne, %1, %c0_i32_0 : i32
    scf.if %2 {
      %c0_6 = arith.constant 0 : index
      %c0_7 = arith.constant 0 : index
      %12 = vector.load %arg2[%c0_6, %c0_7] : memref<128x128xf32, #tpu.memory_space<vmem>>, vector<128x128xf32>
      %c0_8 = arith.constant 0 : index
      %c0_9 = arith.constant 0 : index
      %13 = vector.load %arg3[%c0_8, %c0_9] : memref<128x128xf32, #tpu.memory_space<vmem>>, vector<128x128xf32>
      %cst_10 = arith.constant dense<0.000000e+00> : vector<128x128xf32>
      %14 = tpu.matmul %12, %13, %cst_10 {dimension_numbers = #tpu.dot_dimension_numbers<[1], [0], [0], [1], [0, 0, 1, 1], [], []>} : vector<128x128xf32>, vector<128x128xf32>, vector<128x128xf32> -> vector<128x128xf32>
      %c0_11 = arith.constant 0 : index
      %c0_12 = arith.constant 0 : index
      %15 = vector.load %arg4[%c0_11, %c0_12] : memref<1x128xf32, #tpu.memory_space<vmem>>, vector<1x128xf32>
      %16 = vector.broadcast %15 : vector<1x128xf32> to vector<128x128xf32>
      %17 = arith.addf %14, %16 : vector<128x128xf32>
      %cst_13 = arith.constant 0.000000e+00 : f32
      %18 = vector.broadcast %cst_13 : f32 to vector<128x128xf32>
      %19 = arith.maximumf %17, %18 : vector<128x128xf32>
      %c0_14 = arith.constant 0 : index
      %c0_15 = arith.constant 0 : index
      %20 = vector.load %arg5[%c0_14, %c0_15] : memref<128x128xf32, #tpu.memory_space<vmem>>, vector<128x128xf32>
      %cst_16 = arith.constant dense<0.000000e+00> : vector<128x128xf32>
      %21 = tpu.matmul %19, %20, %cst_16 {dimension_numbers = #tpu.dot_dimension_numbers<[1], [0], [0], [1], [0, 0, 1, 1], [], []>} : vector<128x128xf32>, vector<128x128xf32>, vector<128x128xf32> -> vector<128x128xf32>
      %c0_17 = arith.constant 0 : index
      %c0_18 = arith.constant 0 : index
      %22 = vector.load %arg6[%c0_17, %c0_18] : memref<1x128xf32, #tpu.memory_space<vmem>>, vector<1x128xf32>
      %23 = vector.broadcast %22 : vector<1x128xf32> to vector<128x128xf32>
      %24 = arith.addf %21, %23 : vector<128x128xf32>
      %c0_19 = arith.constant 0 : index
      %c0_20 = arith.constant 0 : index
      %25 = vector.load %arg8[%c0_19, %c0_20] : memref<128x128xf32, #tpu.memory_space<vmem>>, vector<128x128xf32>
      tpu.vector_store %arg8[%c0_19, %c0_20], %24 {strides = array<i32>} : memref<128x128xf32, #tpu.memory_space<vmem>>, vector<128x128xf32>,
    } else {
    }
    %c0 = arith.constant 0 : index
    %c0_1 = arith.constant 0 : index
    %3 = vector.load %arg1[%c0, %c0_1] : memref<8x1xi32, #tpu.memory_space<vmem>>, vector<8x1xi32>
    %4 = tpu.iota {dimensions = array<i32: 1>} : vector<8x128xi32>
    %5 = vector.broadcast %3 : vector<8x1xi32> to vector<8x128xi32>
    %6 = arith.cmpi eq, %4, %5 : vector<8x128xi32>
    %7 = arith.extui %6 : vector<8x128xi1> to vector<8x128xi32>
    %8 = arith.sitofp %7 : vector<8x128xi32> to vector<8x128xf32>
    %c0_2 = arith.constant 0 : index
    %c0_3 = arith.constant 0 : index
    %9 = vector.load %arg8[%c0_2, %c0_3] : memref<128x128xf32, #tpu.memory_space<vmem>>, vector<128x128xf32>
    %cst = arith.constant dense<0.000000e+00> : vector<8x128xf32>
    %10 = tpu.matmul %8, %9, %cst {dimension_numbers = #tpu.dot_dimension_numbers<[1], [0], [0], [1], [0, 0, 1, 1], [], []>} : vector<8x128xf32>, vector<128x128xf32>, vector<8x128xf32> -> vector<8x128xf32>
    %c0_4 = arith.constant 0 : index
    %c0_5 = arith.constant 0 : index
    %11 = vector.load %arg7[%c0_4, %c0_5] : memref<8x128xf32, #tpu.memory_space<vmem>>, vector<8x128xf32>
    tpu.vector_store %arg7[%c0_4, %c0_5], %10 {strides = array<i32>} : memref<8x128xf32, #tpu.memory_space<vmem>>, vector<8x128xf32>,
    return
  }
  func.func @transform_0(%arg0: i32) -> (i32, i32) {
    %c0_i32 = arith.constant 0 : i32
    %c0_i32_0 = arith.constant 0 : i32
    return %arg0, %c0_i32 : i32, i32
  }
  func.func @transform_1(%arg0: i32) -> (i32, i32) {
    %c0_i32 = arith.constant 0 : i32
    %c0_i32_0 = arith.constant 0 : i32
    %c0_i32_1 = arith.constant 0 : i32
    return %c0_i32, %c0_i32_0 : i32, i32
  }
  func.func @transform_2(%arg0: i32) -> (i32, i32) {
    %c0_i32 = arith.constant 0 : i32
    %c0_i32_0 = arith.constant 0 : i32
    %c0_i32_1 = arith.constant 0 : i32
    return %c0_i32, %c0_i32_0 : i32, i32
  }
  func.func @transform_3(%arg0: i32) -> (i32, i32) {
    %c0_i32 = arith.constant 0 : i32
    %c0_i32_0 = arith.constant 0 : i32
    %c0_i32_1 = arith.constant 0 : i32
    return %c0_i32, %c0_i32_0 : i32, i32
  }
  func.func @transform_4(%arg0: i32) -> (i32, i32) {
    %c0_i32 = arith.constant 0 : i32
    %c0_i32_0 = arith.constant 0 : i32
    %c0_i32_1 = arith.constant 0 : i32
    return %c0_i32, %c0_i32_0 : i32, i32
  }
  func.func @transform_5(%arg0: i32) -> (i32, i32) {
    %c0_i32 = arith.constant 0 : i32
    %c0_i32_0 = arith.constant 0 : i32
    %c0_i32_1 = arith.constant 0 : i32
    return %c0_i32, %c0_i32_0 : i32, i32
  }
  func.func @transform_6(%arg0: i32) -> (i32, i32) {
    %c0_i32 = arith.constant 0 : i32
    %c0_i32_0 = arith.constant 0 : i32
    return %arg0, %c0_i32 : i32, i32
  }
}

</mosaic_0001>

<llo_original>
// kernel: tpu_custom_call.1
$region0: #{tpu_custom_call.1}
  #allocation0 [shape = 'u32[]', space=smem, size = 0x4, offset = 0x4, fixed_abs, tag = 'smem constant byte address 0x4 - core index']
  #allocation1 [shape = 'u32[144,128]{1,0:T(1,128)}', space=vmem, size = 0x12000, scoped, tag = 'internal scratch']
  #allocation2 [shape = 'f32[128,128]{1,0:T(8,128)}', space=vmem, size = 0x10000, scoped, tag = 'scratch operand']
  %s0 = inlined_call_operand.vmem [shape: s32[8,1], index: 0, kind: input, shape index: {}]
  %s1 = inlined_call_operand.hbm [shape: f32[128,128], index: 1, kind: input, shape index: {}]
  %s2 = inlined_call_operand.hbm [shape: f32[128,128], index: 2, kind: input, shape index: {}]
  %s3 = inlined_call_operand.vmem [shape: f32[1,128], index: 3, kind: input, shape index: {}]
  %s4 = inlined_call_operand.hbm [shape: f32[128,128], index: 4, kind: input, shape index: {}]
  %s5 = inlined_call_operand.vmem [shape: f32[1,128], index: 5, kind: input, shape index: {}]
  %s6 = inlined_call_operand.hbm [shape: f32[8,128], index: 6, kind: output, shape index: {}]
  %s7 = sld [smem:[#allocation0]]
  $region50: #{tpu_custom_call.1} parent=0
    _
  %s9 = ssub.s32 1, %s7
  %s10 = scalar_select 0, %s9, %s7
  $region1: #{tpu_custom_call.1} parent=0
    #allocation3 [shape = 'u8[65536]{0}', space=vmem, size = 0x10000, scoped, tag = 'input window, operand 1, single buffered']
    #allocation4 [shape = 's32[1]{0}', space=sflag, size = 0x4, scoped, tag = 'scoped memory for tpu_custom_call.1']
    #allocation5 [shape = 's32[1]{0}', space=sflag, size = 0x4, scoped, tag = 'scoped memory for tpu_custom_call.1']
    #allocation6 [shape = 'u8[65536]{0}', space=vmem, size = 0x10000, scoped, tag = 'input window, operand 2, single buffered']
    #allocation7 [shape = 's32[1]{0}', space=sflag, size = 0x4, scoped, tag = 'scoped memory for tpu_custom_call.1']
    #allocation8 [shape = 'u8[65536]{0}', space=vmem, size = 0x10000, scoped, tag = 'input window, operand 4, single buffered']
    #allocation9 [shape = 'u8[4096]{0}', space=vmem, size = 0x1000, scoped, tag = 'output window, operand 0, single buffered']
    %11 = vsyncpa [#allocation4], 0
    %12 = vsyncpa [#allocation7], 0
    %13 = vsyncpa [#allocation5], 0
    // Predicated region
    $region2: #{tpu_custom_call.1} parent=1 // pred_check
      _
    $region3: #{tpu_custom_call.1} parent=1 // pred_check_branch
      %15 = sbr.rel (0) target = $region5
    $region4: #{tpu_custom_call.1} parent=1 // pred_region
      _
    $region5: #{tpu_custom_call.1} parent=1 // pred_fallthru
      _
    // Predicated region
    $region6: #{tpu_custom_call.1} parent=1 // pred_check
      _
    $region7: #{tpu_custom_call.1} parent=1 // pred_check_branch
      %17 = sbr.rel (0) target = $region9
    $region8: #{tpu_custom_call.1} parent=1 // pred_region
      %s19 = ssub.s32 2048, 2048
      %20 = vsyncadd [#allocation4], %s19
      %s21 = sshll.u32 [#allocation3], 4
      %s22 = int_to_ptr.vmem [resolvable:$true] %s21
      %27 = dma.hbm_to_vmem [thread:$0]  %s1, 2048, %s22, [#allocation4], 128, 128, 8
    $region9: #{tpu_custom_call.1} parent=1 // pred_fallthru
      _
    // Predicated region
    $region10: #{tpu_custom_call.1} parent=1 // pred_check
      _
    $region11: #{tpu_custom_call.1} parent=1 // pred_check_branch
      %29 = sbr.rel (0) target = $region13
    $region12: #{tpu_custom_call.1} parent=1 // pred_region
      %s31 = ssub.s32 2048, 2048
      %32 = vsyncadd [#allocation7], %s31
      %s33 = sshll.u32 [#allocation6], 4
      %s34 = int_to_ptr.vmem [resolvable:$true] %s33
      %39 = dma.hbm_to_vmem [thread:$0]  %s2, 2048, %s34, [#allocation7], 128, 128, 8
    $region13: #{tpu_custom_call.1} parent=1 // pred_fallthru
      _
    // Predicated region
    $region14: #{tpu_custom_call.1} parent=1 // pred_check
      _
    $region15: #{tpu_custom_call.1} parent=1 // pred_check_branch
      %41 = sbr.rel (0) target = $region17
    $region16: #{tpu_custom_call.1} parent=1 // pred_region
      _
    $region17: #{tpu_custom_call.1} parent=1 // pred_fallthru
      _
    // Predicated region
    $region18: #{tpu_custom_call.1} parent=1 // pred_check
      _
    $region19: #{tpu_custom_call.1} parent=1 // pred_check_branch
      %43 = sbr.rel (0) target = $region21
    $region20: #{tpu_custom_call.1} parent=1 // pred_region
      %s45 = ssub.s32 2048, 2048
      %46 = vsyncadd [#allocation7], %s45
      %s47 = sshll.u32 [#allocation8], 4
      %s48 = int_to_ptr.vmem [resolvable:$true] %s47
      %53 = dma.hbm_to_vmem [thread:$0]  %s4, 2048, %s48, [#allocation7], 128, 128, 8
    $region21: #{tpu_custom_call.1} parent=1 // pred_fallthru
      _
    // Predicated region
    $region22: #{tpu_custom_call.1} parent=1 // pred_check
      _
    $region23: #{tpu_custom_call.1} parent=1 // pred_check_branch
      %55 = sbr.rel (0) target = $region25
    $region24: #{tpu_custom_call.1} parent=1 // pred_region
      _
    $region25: #{tpu_custom_call.1} parent=1 // pred_fallthru
      _
    // Predicated region
    $region26: #{tpu_custom_call.1} parent=1 // pred_check
      _
    $region27: #{tpu_custom_call.1} parent=1 // pred_check_branch
      %57 = sbr.rel (0) target = $region29
    $region28: #{tpu_custom_call.1} parent=1 // pred_region
      %58 = dma.done [#allocation4], 2048
    $region29: #{tpu_custom_call.1} parent=1 // pred_fallthru
      _
    // Predicated region
    $region30: #{tpu_custom_call.1} parent=1 // pred_check
      _
    $region31: #{tpu_custom_call.1} parent=1 // pred_check_branch
      %60 = sbr.rel (0) target = $region33
    $region32: #{tpu_custom_call.1} parent=1 // pred_region
      %61 = dma.done [#allocation7], 2048
    $region33: #{tpu_custom_call.1} parent=1 // pred_fallthru
      _
    // Predicated region
    $region34: #{tpu_custom_call.1} parent=1 // pred_check
      _
    $region35: #{tpu_custom_call.1} parent=1 // pred_check_branch
      %63 = sbr.rel (0) target = $region37
    $region36: #{tpu_custom_call.1} parent=1 // pred_region
      %64 = dma.done [#allocation7], 2048
    $region37: #{tpu_custom_call.1} parent=1 // pred_fallthru
      _
    %p65 = scmp.eq.s32.totalorder 0, 0
    // Predicated region
    $region38: #{tpu_custom_call.1} parent=1 // pred_check
      %p66 = pneg %p65
    $region39: #{tpu_custom_call.1} parent=1 // pred_check_branch
      %68 = sbr.rel (%p66) target = $region41
    $region40: #{tpu_custom_call.1} parent=1 // pred_region
      %v69 = vld [vmem:[#allocation3] sm:$0xff]
      %v70 = vld [vmem:[#allocation3 + $0x8] sm:$0xff]
      %v71 = vld [vmem:[#allocation3 + $0x10] sm:$0xff]
      %v72 = vld [vmem:[#allocation3 + $0x18] sm:$0xff]
      %v73 = vld [vmem:[#allocation3 + $0x20] sm:$0xff]
      %v74 = vld [vmem:[#allocation3 + $0x28] sm:$0xff]
      %v75 = vld [vmem:[#allocation3 + $0x30] sm:$0xff]
      %v76 = vld [vmem:[#allocation3 + $0x38] sm:$0xff]
      %v77 = vld [vmem:[#allocation3 + $0x40] sm:$0xff]
      %v78 = vld [vmem:[#allocation3 + $0x48] sm:$0xff]
      %v79 = vld [vmem:[#allocation3 + $0x50] sm:$0xff]
      %v80 = vld [vmem:[#allocation3 + $0x58] sm:$0xff]
      %v81 = vld [vmem:[#allocation3 + $0x60] sm:$0xff]
      %v82 = vld [vmem:[#allocation3 + $0x68] sm:$0xff]
      %v83 = vld [vmem:[#allocation3 + $0x70] sm:$0xff]
      %v84 = vld [vmem:[#allocation3 + $0x78] sm:$0xff]
      %v85 = vld [vmem:[#allocation6] sm:$0xff]
      %v86 = vld [vmem:[#allocation6 + $0x8] sm:$0xff]
      %v87 = vld [vmem:[#allocation6 + $0x10] sm:$0xff]
      %v88 = vld [vmem:[#allocation6 + $0x18] sm:$0xff]
      %v89 = vld [vmem:[#allocation6 + $0x20] sm:$0xff]
      %v90 = vld [vmem:[#allocation6 + $0x28] sm:$0xff]
      %v91 = vld [vmem:[#allocation6 + $0x30] sm:$0xff]
      %v92 = vld [vmem:[#allocation6 + $0x38] sm:$0xff]
      %v93 = vld [vmem:[#allocation6 + $0x40] sm:$0xff]
      %v94 = vld [vmem:[#allocation6 + $0x48] sm:$0xff]
      %v95 = vld [vmem:[#allocation6 + $0x50] sm:$0xff]
      %v96 = vld [vmem:[#allocation6 + $0x58] sm:$0xff]
      %v97 = vld [vmem:[#allocation6 + $0x60] sm:$0xff]
      %v98 = vld [vmem:[#allocation6 + $0x68] sm:$0xff]
      %v99 = vld [vmem:[#allocation6 + $0x70] sm:$0xff]
      %v100 = vld [vmem:[#allocation6 + $0x78] sm:$0xff]
      %v101 = vld [vmem:[%s3] sm:$0x1]
      %v103 = vlaneseq
      %v104 = vshrl.u32 %v103, 7
      %v105 = vsub.s32 0, %v104
      %v106 = vrot.slane %v101, %v105
      %108 = vmatprep.subr.mxu0 0.0
      %109 = vmatpush1.msra.mxu0 %v85
      %110 = vmatprep.subr.mxu0 0.0
      %111 = vmatpush1.msra.mxu0 %v86
      %112 = vmatprep.subr.mxu0 0.0
      %113 = vmatpush1.msra.mxu0 %v87
      %114 = vmatprep.subr.mxu0 0.0
      %115 = vmatpush1.msra.mxu0 %v88
      %116 = vmatprep.subr.mxu0 0.0
      %117 = vmatpush1.msra.mxu0 %v89
      %118 = vmatprep.subr.mxu0 0.0
      %119 = vmatpush1.msra.mxu0 %v90
      %120 = vmatprep.subr.mxu0 0.0
      %121 = vmatpush1.msra.mxu0 %v91
      %122 = vmatprep.subr.mxu0 0.0
      %123 = vmatpush1.msra.mxu0 %v92
      %124 = vmatprep.subr.mxu0 0.0
      %125 = vmatpush1.msra.mxu0 %v93
      %126 = vmatprep.subr.mxu0 0.0
      %127 = vmatpush1.msra.mxu0 %v94
      %128 = vmatprep.subr.mxu0 0.0
      %129 = vmatpush1.msra.mxu0 %v95
      %130 = vmatprep.subr.mxu0 0.0
      %131 = vmatpush1.msra.mxu0 %v96
      %132 = vmatprep.subr.mxu0 0.0
      %133 = vmatpush1.msra.mxu0 %v97
      %134 = vmatprep.subr.mxu0 0.0
      %135 = vmatpush1.msra.mxu0 %v98
      %136 = vmatprep.subr.mxu0 0.0
      %137 = vmatpush1.msra.mxu0 %v99
      %138 = vmatprep.subr.mxu0 0.0
      %139 = vmatpush1.msra.mxu0 %v100
      %140 = vmatprep.subr.mxu0 0.0
      %141 = vmatpush1.msra.mxu0 0.0
      %142 = vmatprep.subr.mxu0 0.0
      %143 = vmatpush1.msra.mxu0 0.0
      %144 = vmatprep.subr.mxu0 0.0
      %145 = vmatpush1.msra.mxu0 0.0
      %146 = vmatprep.subr.mxu0 0.0
      %147 = vmatpush1.msra.mxu0 0.0
      %148 = vmatprep.subr.mxu0 0.0
      %149 = vmatpush1.msra.mxu0 0.0
      %150 = vmatprep.subr.mxu0 0.0
      %151 = vmatpush1.msra.mxu0 0.0
      %152 = vmatprep.subr.mxu0 0.0
      %153 = vmatpush1.msra.mxu0 0.0
      %154 = vmatprep.subr.mxu0 0.0
      %155 = vmatpush1.msra.mxu0 0.0
      %156 = vmatprep.subr.mxu0 0.0
      %157 = vmatpush1.msra.mxu0 0.0
      %158 = vmatprep.subr.mxu0 0.0
      %159 = vmatpush1.msra.mxu0 0.0
      %160 = vmatprep.subr.mxu0 0.0
      %161 = vmatpush1.msra.mxu0 0.0
      %162 = vmatprep.subr.mxu0 0.0
      %163 = vmatpush1.msra.mxu0 0.0
      %164 = vmatprep.subr.mxu0 0.0
      %165 = vmatpush1.msra.mxu0 0.0
      %166 = vmatprep.subr.mxu0 0.0
      %167 = vmatpush1.msra.mxu0 0.0
      %168 = vmatprep.subr.mxu0 0.0
      %169 = vmatpush1.msra.mxu0 0.0
      %170 = vmatprep.subr.mxu0 0.0
      %171 = vmatpush1.msra.mxu0 0.0
      %172 = vmatprep.mubr.f32.mxu0 0.0
      %173 = vmatmul.mubr.f32.gmra.mrb[0].mxu0 %v69
      %v174 = vpop.f32.mrb[0].mxu0
      %v175 = vadd.f32 %v106, %v174
      %v176 = vpop.f32.mrb[0].mxu0
      %177 = vmatprep.mubr.f32.mxu0 0.0
      %178 = vmatmul.mubr.f32.gmra.mrb[0].mxu0 %v70
      %v179 = vpop.f32.mrb[0].mxu0
      %v180 = vadd.f32 %v106, %v179
      %v181 = vpop.f32.mrb[0].mxu0
      %182 = vmatprep.mubr.f32.mxu0 0.0
      %183 = vmatmul.mubr.f32.gmra.mrb[0].mxu0 %v71
      %v184 = vpop.f32.mrb[0].mxu0
      %v185 = vadd.f32 %v106, %v184
      %v186 = vpop.f32.mrb[0].mxu0
      %187 = vmatprep.mubr.f32.mxu0 0.0
      %188 = vmatmul.mubr.f32.gmra.mrb[0].mxu0 %v72
      %v189 = vpop.f32.mrb[0].mxu0
      %v190 = vadd.f32 %v106, %v189
      %v191 = vpop.f32.mrb[0].mxu0
      %192 = vmatprep.mubr.f32.mxu0 0.0
      %193 = vmatmul.mubr.f32.gmra.mrb[0].mxu0 %v73
      %v194 = vpop.f32.mrb[0].mxu0
      %v195 = vadd.f32 %v106, %v194
      %v196 = vpop.f32.mrb[0].mxu0
      %197 = vmatprep.mubr.f32.mxu0 0.0
      %198 = vmatmul.mubr.f32.gmra.mrb[0].mxu0 %v74
      %v199 = vpop.f32.mrb[0].mxu0
      %v200 = vadd.f32 %v106, %v199
      %v201 = vpop.f32.mrb[0].mxu0
      %202 = vmatprep.mubr.f32.mxu0 0.0
      %203 = vmatmul.mubr.f32.gmra.mrb[0].mxu0 %v75
      %v204 = vpop.f32.mrb[0].mxu0
      %v205 = vadd.f32 %v106, %v204
      %v206 = vpop.f32.mrb[0].mxu0
      %207 = vmatprep.mubr.f32.mxu0 0.0
      %208 = vmatmul.mubr.f32.gmra.mrb[0].mxu0 %v76
      %v209 = vpop.f32.mrb[0].mxu0
      %v210 = vadd.f32 %v106, %v209
      %v211 = vpop.f32.mrb[0].mxu0
      %212 = vmatprep.mubr.f32.mxu0 0.0
      %213 = vmatmul.mubr.f32.gmra.mrb[0].mxu0 %v77
      %v214 = vpop.f32.mrb[0].mxu0
      %v215 = vadd.f32 %v106, %v214
      %v216 = vpop.f32.mrb[0].mxu0
      %217 = vmatprep.mubr.f32.mxu0 0.0
      %218 = vmatmul.mubr.f32.gmra.mrb[0].mxu0 %v78
      %v219 = vpop.f32.mrb[0].mxu0
      %v220 = vadd.f32 %v106, %v219
      %v221 = vpop.f32.mrb[0].mxu0
      %222 = vmatprep.mubr.f32.mxu0 0.0
      %223 = vmatmul.mubr.f32.gmra.mrb[0].mxu0 %v79
      %v224 = vpop.f32.mrb[0].mxu0
      %v225 = vadd.f32 %v106, %v224
      %v226 = vpop.f32.mrb[0].mxu0
      %227 = vmatprep.mubr.f32.mxu0 0.0
      %228 = vmatmul.mubr.f32.gmra.mrb[0].mxu0 %v80
      %v229 = vpop.f32.mrb[0].mxu0
      %v230 = vadd.f32 %v106, %v229
      %v231 = vpop.f32.mrb[0].mxu0
      %232 = vmatprep.mubr.f32.mxu0 0.0
      %233 = vmatmul.mubr.f32.gmra.mrb[0].mxu0 %v81
      %v234 = vpop.f32.mrb[0].mxu0
      %v235 = vadd.f32 %v106, %v234
      %v236 = vpop.f32.mrb[0].mxu0
      %237 = vmatprep.mubr.f32.mxu0 0.0
      %238 = vmatmul.mubr.f32.gmra.mrb[0].mxu0 %v82
      %v239 = vpop.f32.mrb[0].mxu0
      %v240 = vadd.f32 %v106, %v239
      %v241 = vpop.f32.mrb[0].mxu0
      %242 = vmatprep.mubr.f32.mxu0 0.0
      %243 = vmatmul.mubr.f32.gmra.mrb[0].mxu0 %v83
      %v244 = vpop.f32.mrb[0].mxu0
      %v245 = vadd.f32 %v106, %v244
      %v246 = vpop.f32.mrb[0].mxu0
      %247 = vmatprep.mubr.f32.mxu0 0.0
      %248 = vmatmul.mubr.f32.gmra.mrb[0].mxu0 %v84
      %v249 = vpop.f32.mrb[0].mxu0
      %v250 = vadd.f32 %v106, %v249
      %v251 = vpop.f32.mrb[0].mxu0
      %252 = vdwg.mxu0
      %v253 = vmax.f32 %v175, 0.0
      %v254 = vmax.f32 %v180, 0.0
      %v255 = vmax.f32 %v185, 0.0
      %v256 = vmax.f32 %v190, 0.0
      %v257 = vmax.f32 %v195, 0.0
      %v258 = vmax.f32 %v200, 0.0
      %v259 = vmax.f32 %v205, 0.0
      %v260 = vmax.f32 %v210, 0.0
      %v261 = vmax.f32 %v215, 0.0
      %v262 = vmax.f32 %v220, 0.0
      %v263 = vmax.f32 %v225, 0.0
      %v264 = vmax.f32 %v230, 0.0
      %v265 = vmax.f32 %v235, 0.0
      %v266 = vmax.f32 %v240, 0.0
      %v267 = vmax.f32 %v245, 0.0
      %v268 = vmax.f32 %v250, 0.0
      %v269 = vld [vmem:[#allocation8] sm:$0xff]
      %v270 = vld [vmem:[#allocation8 + $0x8] sm:$0xff]
      %v271 = vld [vmem:[#allocation8 + $0x10] sm:$0xff]
      %v272 = vld [vmem:[#allocation8 + $0x18] sm:$0xff]
      %v273 = vld [vmem:[#allocation8 + $0x20] sm:$0xff]
      %v274 = vld [vmem:[#allocation8 + $0x28] sm:$0xff]
      %v275 = vld [vmem:[#allocation8 + $0x30] sm:$0xff]
      %v276 = vld [vmem:[#allocation8 + $0x38] sm:$0xff]
      %v277 = vld [vmem:[#allocation8 + $0x40] sm:$0xff]
      %v278 = vld [vmem:[#allocation8 + $0x48] sm:$0xff]
      %v279 = vld [vmem:[#allocation8 + $0x50] sm:$0xff]
      %v280 = vld [vmem:[#allocation8 + $0x58] sm:$0xff]
      %v281 = vld [vmem:[#allocation8 + $0x60] sm:$0xff]
      %v282 = vld [vmem:[#allocation8 + $0x68] sm:$0xff]
      %v283 = vld [vmem:[#allocation8 + $0x70] sm:$0xff]
      %v284 = vld [vmem:[#allocation8 + $0x78] sm:$0xff]
      %v285 = vld [vmem:[%s5] sm:$0x1]
      %v287 = vlaneseq
      %v288 = vshrl.u32 %v287, 7
      %v289 = vsub.s32 0, %v288
      %v290 = vrot.slane %v285, %v289
      %292 = vmatprep.subr.mxu0 0.0
      %293 = vmatpush1.msra.mxu0 %v269
      %294 = vmatprep.subr.mxu0 0.0
      %295 = vmatpush1.msra.mxu0 %v270
      %296 = vmatprep.subr.mxu0 0.0
      %297 = vmatpush1.msra.mxu0 %v271
      %298 = vmatprep.subr.mxu0 0.0
      %299 = vmatpush1.msra.mxu0 %v272
      %300 = vmatprep.subr.mxu0 0.0
      %301 = vmatpush1.msra.mxu0 %v273
      %302 = vmatprep.subr.mxu0 0.0
      %303 = vmatpush1.msra.mxu0 %v274
      %304 = vmatprep.subr.mxu0 0.0
      %305 = vmatpush1.msra.mxu0 %v275
      %306 = vmatprep.subr.mxu0 0.0
      %307 = vmatpush1.msra.mxu0 %v276
      %308 = vmatprep.subr.mxu0 0.0
      %309 = vmatpush1.msra.mxu0 %v277
      %310 = vmatprep.subr.mxu0 0.0
      %311 = vmatpush1.msra.mxu0 %v278
      %312 = vmatprep.subr.mxu0 0.0
      %313 = vmatpush1.msra.mxu0 %v279
      %314 = vmatprep.subr.mxu0 0.0
      %315 = vmatpush1.msra.mxu0 %v280
      %316 = vmatprep.subr.mxu0 0.0
      %317 = vmatpush1.msra.mxu0 %v281
      %318 = vmatprep.subr.mxu0 0.0
      %319 = vmatpush1.msra.mxu0 %v282
      %320 = vmatprep.subr.mxu0 0.0
      %321 = vmatpush1.msra.mxu0 %v283
      %322 = vmatprep.subr.mxu0 0.0
      %323 = vmatpush1.msra.mxu0 %v284
      %324 = vmatprep.subr.mxu0 0.0
      %325 = vmatpush1.msra.mxu0 0.0
      %326 = vmatprep.subr.mxu0 0.0
      %327 = vmatpush1.msra.mxu0 0.0
      %328 = vmatprep.subr.mxu0 0.0
      %329 = vmatpush1.msra.mxu0 0.0
      %330 = vmatprep.subr.mxu0 0.0
      %331 = vmatpush1.msra.mxu0 0.0
      %332 = vmatprep.subr.mxu0 0.0
      %333 = vmatpush1.msra.mxu0 0.0
      %334 = vmatprep.subr.mxu0 0.0
      %335 = vmatpush1.msra.mxu0 0.0
      %336 = vmatprep.subr.mxu0 0.0
      %337 = vmatpush1.msra.mxu0 0.0
      %338 = vmatprep.subr.mxu0 0.0
      %339 = vmatpush1.msra.mxu0 0.0
      %340 = vmatprep.subr.mxu0 0.0
      %341 = vmatpush1.msra.mxu0 0.0
      %342 = vmatprep.subr.mxu0 0.0
      %343 = vmatpush1.msra.mxu0 0.0
      %344 = vmatprep.subr.mxu0 0.0
      %345 = vmatpush1.msra.mxu0 0.0
      %346 = vmatprep.subr.mxu0 0.0
      %347 = vmatpush1.msra.mxu0 0.0
      %348 = vmatprep.subr.mxu0 0.0
      %349 = vmatpush1.msra.mxu0 0.0
      %350 = vmatprep.subr.mxu0 0.0
      %351 = vmatpush1.msra.mxu0 0.0
      %352 = vmatprep.subr.mxu0 0.0
      %353 = vmatpush1.msra.mxu0 0.0
      %354 = vmatprep.subr.mxu0 0.0
      %355 = vmatpush1.msra.mxu0 0.0
      %356 = vmatprep.mubr.f32.mxu0 0.0
      %357 = vmatmul.mubr.f32.gmra.mrb[0].mxu0 %v253
      %v358 = vpop.f32.mrb[0].mxu0
      %v359 = vadd.f32 %v290, %v358
      %v360 = vpop.f32.mrb[0].mxu0
      %361 = vmatprep.mubr.f32.mxu0 0.0
      %362 = vmatmul.mubr.f32.gmra.mrb[0].mxu0 %v254
      %v363 = vpop.f32.mrb[0].mxu0
      %v364 = vadd.f32 %v290, %v363
      %v365 = vpop.f32.mrb[0].mxu0
      %366 = vmatprep.mubr.f32.mxu0 0.0
      %367 = vmatmul.mubr.f32.gmra.mrb[0].mxu0 %v255
      %v368 = vpop.f32.mrb[0].mxu0
      %v369 = vadd.f32 %v290, %v368
      %v370 = vpop.f32.mrb[0].mxu0
      %371 = vmatprep.mubr.f32.mxu0 0.0
      %372 = vmatmul.mubr.f32.gmra.mrb[0].mxu0 %v256
      %v373 = vpop.f32.mrb[0].mxu0
      %v374 = vadd.f32 %v290, %v373
      %v375 = vpop.f32.mrb[0].mxu0
      %376 = vmatprep.mubr.f32.mxu0 0.0
      %377 = vmatmul.mubr.f32.gmra.mrb[0].mxu0 %v257
      %v378 = vpop.f32.mrb[0].mxu0
      %v379 = vadd.f32 %v290, %v378
      %v380 = vpop.f32.mrb[0].mxu0
      %381 = vmatprep.mubr.f32.mxu0 0.0
      %382 = vmatmul.mubr.f32.gmra.mrb[0].mxu0 %v258
      %v383 = vpop.f32.mrb[0].mxu0
      %v384 = vadd.f32 %v290, %v383
      %v385 = vpop.f32.mrb[0].mxu0
      %386 = vmatprep.mubr.f32.mxu0 0.0
      %387 = vmatmul.mubr.f32.gmra.mrb[0].mxu0 %v259
      %v388 = vpop.f32.mrb[0].mxu0
      %v389 = vadd.f32 %v290, %v388
      %v390 = vpop.f32.mrb[0].mxu0
      %391 = vmatprep.mubr.f32.mxu0 0.0
      %392 = vmatmul.mubr.f32.gmra.mrb[0].mxu0 %v260
      %v393 = vpop.f32.mrb[0].mxu0
      %v394 = vadd.f32 %v290, %v393
      %v395 = vpop.f32.mrb[0].mxu0
      %396 = vmatprep.mubr.f32.mxu0 0.0
      %397 = vmatmul.mubr.f32.gmra.mrb[0].mxu0 %v261
      %v398 = vpop.f32.mrb[0].mxu0
      %v399 = vadd.f32 %v290, %v398
      %v400 = vpop.f32.mrb[0].mxu0
      %401 = vmatprep.mubr.f32.mxu0 0.0
      %402 = vmatmul.mubr.f32.gmra.mrb[0].mxu0 %v262
      %v403 = vpop.f32.mrb[0].mxu0
      %v404 = vadd.f32 %v290, %v403
      %v405 = vpop.f32.mrb[0].mxu0
      %406 = vmatprep.mubr.f32.mxu0 0.0
      %407 = vmatmul.mubr.f32.gmra.mrb[0].mxu0 %v263
      %v408 = vpop.f32.mrb[0].mxu0
      %v409 = vadd.f32 %v290, %v408
      %v410 = vpop.f32.mrb[0].mxu0
      %411 = vmatprep.mubr.f32.mxu0 0.0
      %412 = vmatmul.mubr.f32.gmra.mrb[0].mxu0 %v264
      %v413 = vpop.f32.mrb[0].mxu0
      %v414 = vadd.f32 %v290, %v413
      %v415 = vpop.f32.mrb[0].mxu0
      %416 = vmatprep.mubr.f32.mxu0 0.0
      %417 = vmatmul.mubr.f32.gmra.mrb[0].mxu0 %v265
      %v418 = vpop.f32.mrb[0].mxu0
      %v419 = vadd.f32 %v290, %v418
      %v420 = vpop.f32.mrb[0].mxu0
      %421 = vmatprep.mubr.f32.mxu0 0.0
      %422 = vmatmul.mubr.f32.gmra.mrb[0].mxu0 %v266
      %v423 = vpop.f32.mrb[0].mxu0
      %v424 = vadd.f32 %v290, %v423
      %v425 = vpop.f32.mrb[0].mxu0
      %426 = vmatprep.mubr.f32.mxu0 0.0
      %427 = vmatmul.mubr.f32.gmra.mrb[0].mxu0 %v267
      %v428 = vpop.f32.mrb[0].mxu0
      %v429 = vadd.f32 %v290, %v428
      %v430 = vpop.f32.mrb[0].mxu0
      %431 = vmatprep.mubr.f32.mxu0 0.0
      %432 = vmatmul.mubr.f32.gmra.mrb[0].mxu0 %v268
      %v433 = vpop.f32.mrb[0].mxu0
      %v434 = vadd.f32 %v290, %v433
      %v435 = vpop.f32.mrb[0].mxu0
      %436 = vdwg.mxu0
      %437 = vst [vmem:[#allocation2] sm:$0xff] %v359
      %438 = vst [vmem:[#allocation2 + $0x8] sm:$0xff] %v364
      %439 = vst [vmem:[#allocation2 + $0x10] sm:$0xff] %v369
      %440 = vst [vmem:[#allocation2 + $0x18] sm:$0xff] %v374
      %441 = vst [vmem:[#allocation2 + $0x20] sm:$0xff] %v379
      %442 = vst [vmem:[#allocation2 + $0x28] sm:$0xff] %v384
      %443 = vst [vmem:[#allocation2 + $0x30] sm:$0xff] %v389
      %444 = vst [vmem:[#allocation2 + $0x38] sm:$0xff] %v394
      %445 = vst [vmem:[#allocation2 + $0x40] sm:$0xff] %v399
      %446 = vst [vmem:[#allocation2 + $0x48] sm:$0xff] %v404
      %447 = vst [vmem:[#allocation2 + $0x50] sm:$0xff] %v409
      %448 = vst [vmem:[#allocation2 + $0x58] sm:$0xff] %v414
      %449 = vst [vmem:[#allocation2 + $0x60] sm:$0xff] %v419
      %450 = vst [vmem:[#allocation2 + $0x68] sm:$0xff] %v424
      %451 = vst [vmem:[#allocation2 + $0x70] sm:$0xff] %v429
      %452 = vst [vmem:[#allocation2 + $0x78] sm:$0xff] %v434
    $region41: #{tpu_custom_call.1} parent=1 // pred_fallthru
      _
    %v453 = vld [vmem:[%s0] sm:$0xff]
    %v454 = vlaneseq
    %v455 = vand.u32 %v454, 127
    %456 = vset.pattern.permute.xlu0 0
    %457 = vperm.xlu0 %456, %v453
    %v458 = vpop.permute.xlu0 %457
    %vm459 = vcmp.eq.s32.totalorder %v455, %v458
    %v460 = vsel %vm459, 1, 0
    %v461 = vcvt.s32.f32 %v460
    %v462 = vld [vmem:[#allocation2] sm:$0xff]
    %v463 = vld [vmem:[#allocation2 + $0x8] sm:$0xff]
    %v464 = vld [vmem:[#allocation2 + $0x10] sm:$0xff]
    %v465 = vld [vmem:[#allocation2 + $0x18] sm:$0xff]
    %v466 = vld [vmem:[#allocation2 + $0x20] sm:$0xff]
    %v467 = vld [vmem:[#allocation2 + $0x28] sm:$0xff]
    %v468 = vld [vmem:[#allocation2 + $0x30] sm:$0xff]
    %v469 = vld [vmem:[#allocation2 + $0x38] sm:$0xff]
    %v470 = vld [vmem:[#allocation2 + $0x40] sm:$0xff]
    %v471 = vld [vmem:[#allocation2 + $0x48] sm:$0xff]
    %v472 = vld [vmem:[#allocation2 + $0x50] sm:$0xff]
    %v473 = vld [vmem:[#allocation2 + $0x58] sm:$0xff]
    %v474 = vld [vmem:[#allocation2 + $0x60] sm:$0xff]
    %v475 = vld [vmem:[#allocation2 + $0x68] sm:$0xff]
    %v476 = vld [vmem:[#allocation2 + $0x70] sm:$0xff]
    %v477 = vld [vmem:[#allocation2 + $0x78] sm:$0xff]
    %478 = vmatprep.subr.mxu0 0.0
    %479 = vmatpush1.msra.mxu0 %v462
    %480 = vmatprep.subr.mxu0 0.0
    %481 = vmatpush1.msra.mxu0 %v463
    %482 = vmatprep.subr.mxu0 0.0
    %483 = vmatpush1.msra.mxu0 %v464
    %484 = vmatprep.subr.mxu0 0.0
    %485 = vmatpush1.msra.mxu0 %v465
    %486 = vmatprep.subr.mxu0 0.0
    %487 = vmatpush1.msra.mxu0 %v466
    %488 = vmatprep.subr.mxu0 0.0
    %489 = vmatpush1.msra.mxu0 %v467
    %490 = vmatprep.subr.mxu0 0.0
    %491 = vmatpush1.msra.mxu0 %v468
    %492 = vmatprep.subr.mxu0 0.0
    %493 = vmatpush1.msra.mxu0 %v469
    %494 = vmatprep.subr.mxu0 0.0
    %495 = vmatpush1.msra.mxu0 %v470
    %496 = vmatprep.subr.mxu0 0.0
    %497 = vmatpush1.msra.mxu0 %v471
    %498 = vmatprep.subr.mxu0 0.0
    %499 = vmatpush1.msra.mxu0 %v472
    %500 = vmatprep.subr.mxu0 0.0
    %501 = vmatpush1.msra.mxu0 %v473
    %502 = vmatprep.subr.mxu0 0.0
    %503 = vmatpush1.msra.mxu0 %v474
    %504 = vmatprep.subr.mxu0 0.0
    %505 = vmatpush1.msra.mxu0 %v475
    %506 = vmatprep.subr.mxu0 0.0
    %507 = vmatpush1.msra.mxu0 %v476
    %508 = vmatprep.subr.mxu0 0.0
    %509 = vmatpush1.msra.mxu0 %v477
    %510 = vmatprep.subr.mxu0 0.0
    %511 = vmatpush1.msra.mxu0 0.0
    %512 = vmatprep.subr.mxu0 0.0
    %513 = vmatpush1.msra.mxu0 0.0
    %514 = vmatprep.subr.mxu0 0.0
    %515 = vmatpush1.msra.mxu0 0.0
    %516 = vmatprep.subr.mxu0 0.0
    %517 = vmatpush1.msra.mxu0 0.0
    %518 = vmatprep.subr.mxu0 0.0
    %519 = vmatpush1.msra.mxu0 0.0
    %520 = vmatprep.subr.mxu0 0.0
    %521 = vmatpush1.msra.mxu0 0.0
    %522 = vmatprep.subr.mxu0 0.0
    %523 = vmatpush1.msra.mxu0 0.0
    %524 = vmatprep.subr.mxu0 0.0
    %525 = vmatpush1.msra.mxu0 0.0
    %526 = vmatprep.subr.mxu0 0.0
    %527 = vmatpush1.msra.mxu0 0.0
    %528 = vmatprep.subr.mxu0 0.0
    %529 = vmatpush1.msra.mxu0 0.0
    %530 = vmatprep.subr.mxu0 0.0
    %531 = vmatpush1.msra.mxu0 0.0
    %532 = vmatprep.subr.mxu0 0.0
    %533 = vmatpush1.msra.mxu0 0.0
    %534 = vmatprep.subr.mxu0 0.0
    %535 = vmatpush1.msra.mxu0 0.0
    %536 = vmatprep.subr.mxu0 0.0
    %537 = vmatpush1.msra.mxu0 0.0
    %538 = vmatprep.subr.mxu0 0.0
    %539 = vmatpush1.msra.mxu0 0.0
    %540 = vmatprep.subr.mxu0 0.0
    %541 = vmatpush1.msra.mxu0 0.0
    %542 = vmatprep.mubr.f32.mxu0 0.0
    %543 = vmatmul.mubr.f32.gmra.mrb[0].mxu0 %v461
    %v544 = vpop.f32.mrb[0].mxu0
    %v545 = vadd.f32 0.0, %v544
    %v546 = vpop.f32.mrb[0].mxu0
    %547 = vdwg.mxu0
    %548 = vst [vmem:[#allocation9] sm:$0xff] %v545
    // Predicated region
    $region42: #{tpu_custom_call.1} parent=1 // pred_check
      _
    $region43: #{tpu_custom_call.1} parent=1 // pred_check_branch
      %550 = sbr.rel (0) target = $region45
    $region44: #{tpu_custom_call.1} parent=1 // pred_region
      %s552 = ssub.s32 128, 128
      %553 = vsyncadd [#allocation5], %s552
      %s555 = sshll.u32 [#allocation9], 4
      %s556 = int_to_ptr.vmem [resolvable:$true] %s555
      %558 = dma.vmem_to_hbm [thread:$0]  %s556, 128, %s6, [#allocation5]
    $region45: #{tpu_custom_call.1} parent=1 // pred_fallthru
      _
    // Predicated region
    $region46: #{tpu_custom_call.1} parent=1 // pred_check
      _
    $region47: #{tpu_custom_call.1} parent=1 // pred_check_branch
      %560 = sbr.rel (0) target = $region49
    $region48: #{tpu_custom_call.1} parent=1 // pred_region
      %561 = dma.done [#allocation5], 128
    $region49: #{tpu_custom_call.1} parent=1 // pred_fallthru
      _
    %562 = vsyncpa [#allocation4], 1
    %563 = vsyncpa [#allocation7], 1
    %564 = vsyncpa [#allocation5], 1

</llo_original>
